<compile_context>
chip_gen: v7x
topology: tpu7x:2x2x1
jax: 0.10.0
libtpu: 0.0.40
codegen_flags: <defaults>
</compile_context>

<pallas_src>
import jax
import jax.numpy as jnp
import numpy as np
from jax.experimental import pallas as pl
from jax.experimental.pallas import tpu as pltpu


def _round_up(a: int, b: int) -> int:
    return (a + b - 1) // b * b


def _conv1d_padding(kernel_size: int, stride: int):
    """Padding rule of InputLayer.__init__ (PyTorch Conv1d semantics)."""
    if stride == 1:
        total = kernel_size - 1                      # padding='same'
        return total // 2, total - total // 2
    elif kernel_size % 2 != 0:
        p = kernel_size // 2
        return p, p
    else:
        p = kernel_size // 2 - 1
        return p, p


def _num_tensorcores() -> int:
    """Best-effort TensorCores-per-chip (v7x=2, v5e/v6e=1). Defaults to 2."""
    try:
        info = pltpu.get_tpu_info()
        for name in ("num_cores", "core_count", "cores_per_chip",
                     "num_tensor_cores", "tensorcores_per_chip"):
            v = getattr(info, name, None)
            if isinstance(v, int) and v > 0:
                return v
    except Exception:
        pass
    try:
        v = getattr(jax.devices()[0], "num_cores", None)
        if isinstance(v, int) and v > 0:
            return v
    except Exception:
        pass
    return 2  # assume dual-TC so both cores get work when undetectable


def _input_layer_kernel(x_ref, w_ref, posc_ref, out_ref):
    """One (batch tile, L tile) step of conv1d + cls + pos_emb.

    x_ref:    (TB, Lr, sC)  bf16  stride-reshaped padded input (all rows)
    w_ref:    (R, sC, D)    bf16  conv weight grouped by tap row offset
    posc_ref: (TL, D)       f32   pos_emb tile; global row 0 holds cls+pos[0]
    out_ref:  (TB, TL, D)         output tile
    """
    TB, TL, D = out_ref.shape
    R, sC, _ = w_ref.shape
    base = pl.multiple_of(pl.program_id(1) * TL, TL)

    # One aligned dynamic read of the (TL + R - 1)-row halo window; the tiny
    # per-tap shifts below are static slices of the VMEM-resident value.
    xw = x_ref[:, pl.ds(base, TL + R - 1), :]            # (TB, TL+R-1, sC)

    # ceil(K/stride) fused contractions, each with M = TB*TL rows on the MXU.
    acc = jnp.zeros((TB * TL, D), jnp.float32)
    for r in range(R):                                   # tiny static unroll
        xs = xw[:, r:r + TL, :]                          # (TB, TL, sC)
        acc = acc + jnp.dot(xs.reshape(TB * TL, sC), w_ref[r],
                            preferred_element_type=jnp.float32)
    acc = acc.reshape(TB, TL, D)

    # Global row 0 is the cls slot: drop the (meaningless) conv contribution;
    # posc row 0 already carries cls_token + pos_emb[0].
    rows = base + jax.lax.broadcasted_iota(jnp.int32, (TL, D), 0)
    acc = jnp.where(rows == 0, 0.0, acc)

    # Single aligned full-block store.
    out_ref[...] = (acc + posc_ref[...]).astype(out_ref.dtype)


def input_layer(x, conv_w, cls_token, pos_emb, *, kernel_size, stride,
                out_dtype=jnp.float32):
    """Forward pass of InputLayer.

    x:         (B, C_in, L)        f32
    conv_w:    (emb_dim, C_in, K)  f32  (PyTorch Conv1d weight layout, no bias)
    cls_token: (1, 1, emb_dim)
    pos_emb:   (1, L//stride + 1, emb_dim)
    returns:   (B, L//stride + 1, emb_dim) in out_dtype (pass bf16 if the
               downstream transformer consumes bf16 activations).
    """
    B, C, L = x.shape
    D = conv_w.shape[0]
    K, s = kernel_size, stride
    pad_l, pad_r = _conv1d_padding(K, s)
    L_padded = pad_l + L + pad_r
    L_out = (L_padded - K) // s + 1
    L1 = L_out + 1
    assert pos_emb.shape[1] == L1, (pos_emb.shape, L1)
    R = (K - 1) // s + 1                     # taps per reshaped-row group
    sC = s * C

    # ---- Tile selection --------------------------------------------------
    n_tc = _num_tensorcores()
    TL = min(256, _round_up(L1, 8))          # output-row tile (multiple of 8)
    TB = max(1, min(B, max(1, 512 // TL)))   # keep per-step M = TB*TL sizeable
    steps = lambda tb, tl: pl.cdiv(B, tb) * pl.cdiv(L1, tl)
    if steps(TB, TL) < n_tc and B >= 2:      # give every TensorCore work,
        TB = max(1, pl.cdiv(B, n_tc))        # splitting batch first ...
    if steps(TB, TL) < n_tc and L1 > 8:      # ... then the sequence axis
        TL = max(8, _round_up(pl.cdiv(L1, n_tc), 8))
    L1_pad = _round_up(L1, TL)
    B_pad = _round_up(B, TB)
    grid = (B_pad // TB, L1_pad // TL)

    # ---- Stride-reshaped input (no K-duplicated im2col in HBM) ------------
    # E = [stride zeros][pad_l zeros] x [zeros]; each reshaped row of E holds
    # `stride` consecutive positions, so output row j only needs rows
    # j .. j + R - 1 (unit stride).  Row 0 is the cls slot (masked in-kernel).
    left = s + pad_l
    Lr = max(L1_pad + R - 1, pl.cdiv(left + L, s))
    total_len = Lr * s
    right = total_len - left - L
    xt = jnp.transpose(x.astype(jnp.bfloat16), (0, 2, 1))          # (B, L, C)
    xt = jnp.pad(xt, ((0, B_pad - B), (left, right), (0, 0)))
    x2 = xt.reshape(B_pad, Lr, sC)                                  # free

    # ---- Weights grouped by tap row offset: Wg[r, m*C+c, d] = w[d, c, r*s+m]
    w_kcd = jnp.transpose(conv_w, (2, 1, 0))                        # (K, C, D)
    w_kcd = jnp.pad(w_kcd, ((0, R * s - K), (0, 0), (0, 0)))
    wg = w_kcd.reshape(R, sC, D).astype(jnp.bfloat16)

    # ---- cls folded into pos_emb row 0 (batch-invariant, kept in f32) ------
    posc = pos_emb.reshape(L1, D).astype(jnp.float32)
    posc = posc.at[0].add(cls_token.reshape(D).astype(jnp.float32))
    posc = jnp.pad(posc, ((0, L1_pad - L1), (0, 0)))

    # ---- Explicit VMEM budget (headroom under v7x's 64 MiB) ----------------
    def tile_bytes(shape, itemsize):
        dims = list(shape)
        dims[-1] = _round_up(dims[-1], 128)
        if len(dims) >= 2:
            dims[-2] = _round_up(dims[-2], 8)
        return int(np.prod(dims)) * itemsize
    est = (2 * (tile_bytes((TB, Lr, sC), 2) + tile_bytes((R, sC, D), 2)
                + tile_bytes((TL, D), 4)
                + tile_bytes((TB, TL, D), jnp.dtype(out_dtype).itemsize))
           + 2 * tile_bytes((TB, TL, D), 4))          # f32 accumulator value
    vmem_limit = int(min(48 << 20, max(8 << 20, 2 * est)))

    # TODO(synk): when emb_dim < 128 (toy config) the output stores are
    # lane-masked; padding D to 128 would cost 4x HBM writes, and it is moot at
    # production emb_dim, so it is left as-is.
    # TODO(synk): if xprof shows exposed DMA at production sizes, add
    # pipeline_mode=pl.Buffered(3) on the output/posc specs and sweep.
    out = pl.pallas_call(
        _input_layer_kernel,
        out_shape=jax.ShapeDtypeStruct((B_pad, L1_pad, D), out_dtype),
        grid_spec=pltpu.PrefetchScalarGridSpec(
            num_scalar_prefetch=0,
            grid=grid,
            in_specs=[
                # x2 is resident across the L axis (same block index -> DMA'd
                # once per batch tile); it is small because it is NOT
                # K-duplicated im2col.
                pl.BlockSpec((TB, Lr, sC), lambda b, l: (b, 0, 0)),
                pl.BlockSpec((R, sC, D), lambda b, l: (0, 0, 0)),
                pl.BlockSpec((TL, D), lambda b, l: (l, 0)),
            ],
            out_specs=pl.BlockSpec((TB, TL, D), lambda b, l: (b, l, 0)),
        ),
        compiler_params=pltpu.CompilerParams(
            dimension_semantics=("parallel", "parallel"),
            vmem_limit_bytes=vmem_limit),
    )(x2, wg, posc)

    if B_pad != B or L1_pad != L1:
        out = out[:B, :L1]
    return out


def _reference(x, conv_w, cls_token, pos_emb, kernel_size, stride):
    """Pure-JAX f32 reference matching the PyTorch module."""
    B = x.shape[0]
    D = conv_w.shape[0]
    pad_l, pad_r = _conv1d_padding(kernel_size, stride)
    conv = jax.lax.conv_general_dilated(
        x, conv_w, window_strides=(stride,), padding=[(pad_l, pad_r)],
        dimension_numbers=("NCH", "OIH", "NCH"))          # (B, D, L_out)
    seq = jnp.concatenate(
        [jnp.broadcast_to(cls_token, (B, 1, D)),
         jnp.transpose(conv, (0, 2, 1))], axis=1)
    return seq + pos_emb


if __name__ == "__main__":
    fwd = jax.jit(input_layer,
                  static_argnames=("kernel_size", "stride", "out_dtype"))

    # Module config (small): in_channels=4, emb_dim=32, kernel=3, stride=2, L=16
    B, C_in, L = 2, 4, 16
    emb_dim, kernel_size, stride = 32, 3, 2

    key = jax.random.PRNGKey(0)
    kx, kw, kc, kp = jax.random.split(key, 4)
    x = jax.random.normal(kx, (B, C_in, L), jnp.float32)
    conv_w = jax.random.normal(kw, (emb_dim, C_in, kernel_size), jnp.float32) * 0.1
    cls_token = jax.random.normal(kc, (1, 1, emb_dim), jnp.float32)
    pos_emb = jax.random.normal(kp, (1, L // stride + 1, emb_dim), jnp.float32)

    out = fwd(x, conv_w, cls_token, pos_emb, kernel_size=kernel_size, stride=stride)
    out = jax.block_until_ready(out)

    ref = _reference(x, conv_w, cls_token, pos_emb, kernel_size, stride)
    # Tolerance reflects bf16 MXU operands (accumulation stays f32).
    np.testing.assert_allclose(np.asarray(out), np.asarray(ref),
                               rtol=5e-2, atol=5e-2)

    # Second config exercises the stride==1 ('same' padding) path.
    pos_emb1 = jax.random.normal(kp, (1, L + 1, emb_dim), jnp.float32)
    out1 = fwd(x, conv_w, cls_token, pos_emb1, kernel_size=kernel_size, stride=1)
    out1 = jax.block_until_ready(out1)
    ref1 = _reference(x, conv_w, cls_token, pos_emb1, kernel_size, 1)
    np.testing.assert_allclose(np.asarray(out1), np.asarray(ref1),
                               rtol=5e-2, atol=5e-2)

    print("KERNEL_OK")
</pallas_src>

<mosaic_0001>
module attributes {stable_mosaic.version = 11 : i64} {
  func.func @_input_layer_kernel(%arg0: i32, %arg1: i32, %arg2: memref<1x17x8xbf16, #tpu.memory_space<vmem>>, %arg3: memref<2x8x32xbf16, #tpu.memory_space<vmem>>, %arg4: memref<16x32xf32, #tpu.memory_space<vmem>>, %arg5: memref<1x16x32xf32, #tpu.memory_space<vmem>>) attributes {dimension_semantics = [#tpu.dimension_semantics<parallel>, #tpu.dimension_semantics<parallel>], iteration_bounds = array<i64: 2, 1>, scalar_prefetch = 0 : i64, scratch_operands = 0 : i64, tpu.core_type = #tpu.core_type<tc>, window_params = [{transform_indices = @transform_0, window_bounds = array<i64: 1, 17, 8>}, {pipeline_mode = #tpu.pipeline_mode<synchronous>, transform_indices = @transform_1, window_bounds = array<i64: 2, 8, 32>}, {transform_indices = @transform_2, window_bounds = array<i64: 16, 32>}, {transform_indices = @transform_3, window_bounds = array<i64: 1, 16, 32>}]} {
    %c16_i32 = arith.constant 16 : i32
    %0 = arith.muli %arg1, %c16_i32 : i32
    %1 = tpu.assume_multiple %0, 16 : i32
    %c0 = arith.constant 0 : index
    %2 = arith.index_cast %1 : i32 to index
    %c0_0 = arith.constant 0 : index
    %3 = vector.load %arg2[%c0, %2, %c0_0] : memref<1x17x8xbf16, #tpu.memory_space<vmem>>, vector<1x17x8xbf16>
    %cst = arith.constant 0.000000e+00 : f32
    %4 = vector.broadcast %cst : f32 to vector<16x32xf32>
    %5 = vector.extract_strided_slice %3 {offsets = [0, 0, 0], sizes = [1, 16, 8], strides = [1, 1, 1]} : vector<1x17x8xbf16> to vector<1x16x8xbf16>
    %6 = vector.shape_cast %5 : vector<1x16x8xbf16> to vector<16x8xbf16>
    %c0_1 = arith.constant 0 : index
    %c0_2 = arith.constant 0 : index
    %c0_3 = arith.constant 0 : index
    %7 = vector.load %arg3[%c0_1, %c0_2, %c0_3] : memref<2x8x32xbf16, #tpu.memory_space<vmem>>, vector<1x8x32xbf16>
    %8 = vector.shape_cast %7 : vector<1x8x32xbf16> to vector<8x32xbf16>
    %cst_4 = arith.constant dense<0.000000e+00> : vector<16x32xf32>
    %9 = tpu.matmul %6, %8, %cst_4 {dimension_numbers = #tpu.dot_dimension_numbers<[1], [0], [0], [1], [0, 0, 1, 1], [], []>} : vector<16x8xbf16>, vector<8x32xbf16>, vector<16x32xf32> -> vector<16x32xf32>
    %10 = arith.addf %4, %9 : vector<16x32xf32>
    %11 = vector.extract_strided_slice %3 {offsets = [0, 1, 0], sizes = [1, 16, 8], strides = [1, 1, 1]} : vector<1x17x8xbf16> to vector<1x16x8xbf16>
    %12 = vector.shape_cast %11 : vector<1x16x8xbf16> to vector<16x8xbf16>
    %c1 = arith.constant 1 : index
    %c0_5 = arith.constant 0 : index
    %c0_6 = arith.constant 0 : index
    %13 = vector.load %arg3[%c1, %c0_5, %c0_6] : memref<2x8x32xbf16, #tpu.memory_space<vmem>>, vector<1x8x32xbf16>
    %14 = vector.shape_cast %13 : vector<1x8x32xbf16> to vector<8x32xbf16>
    %cst_7 = arith.constant dense<0.000000e+00> : vector<16x32xf32>
    %15 = tpu.matmul %12, %14, %cst_7 {dimension_numbers = #tpu.dot_dimension_numbers<[1], [0], [0], [1], [0, 0, 1, 1], [], []>} : vector<16x8xbf16>, vector<8x32xbf16>, vector<16x32xf32> -> vector<16x32xf32>
    %16 = arith.addf %10, %15 : vector<16x32xf32>
    %17 = vector.shape_cast %16 : vector<16x32xf32> to vector<1x16x32xf32>
    %18 = tpu.iota {dimensions = array<i32: 0>} : vector<16x32xi32>
    %19 = vector.broadcast %1 : i32 to vector<16x32xi32>
    %20 = arith.addi %19, %18 : vector<16x32xi32>
    %c0_i32 = arith.constant 0 : i32
    %21 = vector.broadcast %c0_i32 : i32 to vector<16x32xi32>
    %22 = arith.cmpi eq, %20, %21 : vector<16x32xi32>
    %cst_8 = arith.constant 0.000000e+00 : f32
    %23 = vector.shape_cast %22 : vector<16x32xi1> to vector<1x16x32xi1>
    %24 = vector.broadcast %cst_8 : f32 to vector<1x16x32xf32>
    %25 = arith.select %23, %24, %17 : vector<1x16x32xi1>, vector<1x16x32xf32>
    %c0_9 = arith.constant 0 : index
    %c0_10 = arith.constant 0 : index
    %26 = vector.load %arg4[%c0_9, %c0_10] : memref<16x32xf32, #tpu.memory_space<vmem>>, vector<16x32xf32>
    %27 = vector.shape_cast %26 : vector<16x32xf32> to vector<1x16x32xf32>
    %28 = arith.addf %25, %27 : vector<1x16x32xf32>
    %c0_11 = arith.constant 0 : index
    %c0_12 = arith.constant 0 : index
    %c0_13 = arith.constant 0 : index
    %29 = vector.load %arg5[%c0_11, %c0_12, %c0_13] : memref<1x16x32xf32, #tpu.memory_space<vmem>>, vector<1x16x32xf32>
    tpu.vector_store %arg5[%c0_11, %c0_12, %c0_13], %28 {strides = array<i32>} : memref<1x16x32xf32, #tpu.memory_space<vmem>>, vector<1x16x32xf32>,
    return
  }
  func.func @transform_0(%arg0: i32, %arg1: i32) -> (i32, i32, i32) {
    %c0_i32 = arith.constant 0 : i32
    %c0_i32_0 = arith.constant 0 : i32
    %c0_i32_1 = arith.constant 0 : i32
    return %arg0, %c0_i32, %c0_i32_0 : i32, i32, i32
  }
  func.func @transform_1(%arg0: i32, %arg1: i32) -> (i32, i32, i32) {
    %c0_i32 = arith.constant 0 : i32
    %c0_i32_0 = arith.constant 0 : i32
    %c0_i32_1 = arith.constant 0 : i32
    %c0_i32_2 = arith.constant 0 : i32
    return %c0_i32, %c0_i32_0, %c0_i32_1 : i32, i32, i32
  }
  func.func @transform_2(%arg0: i32, %arg1: i32) -> (i32, i32) {
    %c0_i32 = arith.constant 0 : i32
    %c0_i32_0 = arith.constant 0 : i32
    return %arg1, %c0_i32 : i32, i32
  }
  func.func @transform_3(%arg0: i32, %arg1: i32) -> (i32, i32, i32) {
    %c0_i32 = arith.constant 0 : i32
    %c0_i32_0 = arith.constant 0 : i32
    return %arg0, %arg1, %c0_i32 : i32, i32, i32
  }
}

</mosaic_0001>

<llo_original>
// kernel: input_layer.1
$region0: #{input_layer.1}
  #allocation0 [shape = 'u32[]', space=smem, size = 0x4, offset = 0x4, fixed_abs, tag = 'smem constant byte address 0x4 - core index']
  #allocation1 [shape = 'u32[144,128]{1,0:T(1,128)}', space=vmem, size = 0x12000, scoped, tag = 'internal scratch']
  %s0 = inlined_call_operand.vmem [shape: bf16[2,17,8], index: 0, kind: input, shape index: {}]
  %s1 = inlined_call_operand.vmem [shape: bf16[2,8,32], index: 1, kind: input, shape index: {}]
  %s2 = inlined_call_operand.vmem [shape: f32[16,32], index: 2, kind: input, shape index: {}]
  %s3 = inlined_call_operand.vmem [shape: f32[2,16,32], index: 3, kind: output, shape index: {}]
  %s4 = sld [smem:[#allocation0]]
  $region45: #{input_layer.1} parent=0
    _
  %s6 = ssub.s32 1, %s4
  %s7 = scalar_select 0, %s6, %s4
  loop: start=0, step=1, limit=4
  $region2: #{input_layer.1} parent=0 // loop_pre_header
    _
  $region3: #{input_layer.1} parent=0 // loop_header
    %s9 = sphi 0, %s13
    %p10 = scmp.ge.s32.totalorder %s9, 4
    %s16 = sphi 0, %s28
    %s17 = sphi 0, %s24
    %s18 = sphi 0, %s16
    %s19 = sphi 0, %s17
    %s20 = sphi 0, %s18
    %s21 = sphi 0, %s19
    %s31 = sphi 0, %s33
    %s34 = sphi 0, %s31
    %s35 = sphi 0, %s34
    %s51 = sphi 0, %s35
    %s55 = sphi 0, %s55
    %s57 = sphi 0, %s55
    %s58 = sphi 0, %s57
    %s72 = sphi 0, %s58
    %s78 = sphi 0, %s80
    %s81 = sphi 0, %s78
    %s82 = sphi 0, %s81
    %s98 = sphi 0, %s82
    %s106 = sphi 0, %s108
    %s109 = sphi 0, %s106
    %s110 = sphi 0, %s109
    %s126 = sphi 0, %s110
  $region4: #{input_layer.1} parent=0 // loop_header_branch
    %12 = sbr.rel (%p10) target = $region8
  $region5: #{input_layer.1} parent=0 // loop_body
    %s14 = ssub.s32 %s9, 1
    %s15 = ssub.s32 %s9, 2
    %s22 = sadd.s32 1, %s17
    %p23 = scmp.ge.s32.totalorder %s22, 1
    %s24 = scalar_select %p23, 0, %s22
    %s25 = sadd.s32 1, %s16
    %s26 = scalar_select %p23, %s25, %s16
    %p27 = scmp.ge.s32.totalorder %s26, 2
    %s28 = scalar_select %p27, 0, %s26
    %s29 = ssub.s32 %s16, %s28
    %p30 = scmp.eq.s32.totalorder %s29, 0
    %s32 = sadd.s32 %s31, 1
    %s33 = scalar_select %p30, %s31, %s32
    %p36 = pneg %p30
    %p37 = scmp.eq.s32.totalorder %s9, 1
    %p38 = por %p36, %p37
    %p39 = scmp.ne.s32.totalorder %s31, %s34
    %p40 = scmp.eq.s32.totalorder %s9, 0
    %p41 = por %p39, %p40
    %p42 = scmp.ne.s32.totalorder %s31, %s34
    %p43 = scmp.eq.s32.totalorder %s14, 1
    %p44 = por %p42, %p43
    %p45 = scmp.ne.s32.totalorder %s34, %s35
    %p46 = scmp.eq.s32.totalorder %s14, 0
    %p47 = por %p45, %p46
    %p48 = scmp.ne.s32.totalorder %s34, %s35
    %p49 = scmp.eq.s32.totalorder %s15, 1
    %p50 = por %p48, %p49
    %p52 = scmp.ne.s32.totalorder %s35, %s51
    %p53 = scmp.eq.s32.totalorder %s15, 0
    %p54 = por %p52, %p53
    %s56 = sadd.s32 %s55, 1
    %p59 = scmp.eq.s32.totalorder %s9, 1
    %p60 = scmp.ne.s32.totalorder %s55, %s57
    %p61 = scmp.eq.s32.totalorder %s9, 0
    %p62 = por %p60, %p61
    %p63 = scmp.ne.s32.totalorder %s55, %s57
    %p64 = scmp.eq.s32.totalorder %s14, 1
    %p65 = por %p63, %p64
    %p66 = scmp.ne.s32.totalorder %s57, %s58
    %p67 = scmp.eq.s32.totalorder %s14, 0
    %p68 = por %p66, %p67
    %p69 = scmp.ne.s32.totalorder %s57, %s58
    %p70 = scmp.eq.s32.totalorder %s15, 1
    %p71 = por %p69, %p70
    %p73 = scmp.ne.s32.totalorder %s58, %s72
    %p74 = scmp.eq.s32.totalorder %s15, 0
    %p75 = por %p73, %p74
    %s76 = ssub.s32 %s17, %s24
    %p77 = scmp.eq.s32.totalorder %s76, 0
    %s79 = sadd.s32 %s78, 1
    %s80 = scalar_select %p77, %s78, %s79
    %p83 = pneg %p77
    %p84 = scmp.eq.s32.totalorder %s9, 1
    %p85 = por %p83, %p84
    %p86 = scmp.ne.s32.totalorder %s78, %s81
    %p87 = scmp.eq.s32.totalorder %s9, 0
    %p88 = por %p86, %p87
    %p89 = scmp.ne.s32.totalorder %s78, %s81
    %p90 = scmp.eq.s32.totalorder %s14, 1
    %p91 = por %p89, %p90
    %p92 = scmp.ne.s32.totalorder %s81, %s82
    %p93 = scmp.eq.s32.totalorder %s14, 0
    %p94 = por %p92, %p93
    %p95 = scmp.ne.s32.totalorder %s81, %s82
    %p96 = scmp.eq.s32.totalorder %s15, 1
    %p97 = por %p95, %p96
    %p99 = scmp.ne.s32.totalorder %s82, %s98
    %p100 = scmp.eq.s32.totalorder %s15, 0
    %p101 = por %p99, %p100
    %s102 = ssub.s32 %s16, %s28
    %s103 = ssub.s32 %s17, %s24
    %s104 = sor.u32 %s102, %s103
    %p105 = scmp.eq.s32.totalorder %s104, 0
    %s107 = sadd.s32 %s106, 1
    %s108 = scalar_select %p105, %s106, %s107
    %p111 = pneg %p105
    %p112 = scmp.eq.s32.totalorder %s9, 1
    %p113 = por %p111, %p112
    %p114 = scmp.ne.s32.totalorder %s106, %s109
    %p115 = scmp.eq.s32.totalorder %s9, 0
    %p116 = por %p114, %p115
    %p117 = scmp.ne.s32.totalorder %s106, %s109
    %p118 = scmp.eq.s32.totalorder %s14, 1
    %p119 = por %p117, %p118
    %p120 = scmp.ne.s32.totalorder %s109, %s110
    %p121 = scmp.eq.s32.totalorder %s14, 0
    %p122 = por %p120, %p121
    %p123 = scmp.ne.s32.totalorder %s109, %s110
    %p124 = scmp.eq.s32.totalorder %s15, 1
    %p125 = por %p123, %p124
    %p127 = scmp.ne.s32.totalorder %s110, %s126
    %p128 = scmp.eq.s32.totalorder %s15, 0
    %p129 = por %p127, %p128
    %p130 = scmp.le.s32.totalorder 1, %s9
    %p131 = scmp.lt.s32.totalorder %s9, 3
    %p132 = pnand %p130, %p131
    %p133 = pneg %p132
    // Predicated region
    $region9: #{input_layer.1} parent=5 // pred_check
      _
    $region10: #{input_layer.1} parent=5 // pred_check_branch
      %135 = sbr.rel (%p132) target = $region12
    $region11: #{input_layer.1} parent=5 // pred_region
      %s136 = ssub.s32 %s9, 1
      // Predicated region
      $region13: #{input_layer.1} parent=11 // pred_check
        %p137 = pneg %p68
      $region14: #{input_layer.1} parent=11 // pred_check_branch
        %139 = sbr.rel (%p137) target = $region16
      $region15: #{input_layer.1} parent=11 // pred_region
        _
      $region16: #{input_layer.1} parent=11 // pred_fallthru
        _
      // Predicated region
      $region17: #{input_layer.1} parent=11 // pred_check
        %p140 = pneg %p94
      $region18: #{input_layer.1} parent=11 // pred_check_branch
        %142 = sbr.rel (%p140) target = $region20
      $region19: #{input_layer.1} parent=11 // pred_region
        %s143 = smul.u32 2, %s19
        %p144 = scmp.lt.s32.totalorder %s143, 1
        %s145 = scalar_select %p144, %s143, 1
        %s146 = smul.addr %s145, 8
        %s147 = scalar_lea.vmem %s2, %s146
        %s148 = smul.u32 2, %s19
      $region20: #{input_layer.1} parent=11 // pred_fallthru
        _
    $region12: #{input_layer.1} parent=5 // pred_fallthru
      _
    %p149 = scmp.lt.s32.totalorder %s9, 2
    // Predicated region
    $region21: #{input_layer.1} parent=5 // pred_check
      %p150 = pneg %p149
    $region22: #{input_layer.1} parent=5 // pred_check_branch
      %152 = sbr.rel (%p150) target = $region24
    $region23: #{input_layer.1} parent=5 // pred_region
      // Predicated region
      $region25: #{input_layer.1} parent=23 // pred_check
        %p153 = pneg %p41
      $region26: #{input_layer.1} parent=23 // pred_check_branch
        %155 = sbr.rel (%p153) target = $region28
      $region27: #{input_layer.1} parent=23 // pred_region
        %p156 = scmp.lt.s32.totalorder %s16, 1
        %s157 = scalar_select %p156, %s16, 1
        %s158 = smul.addr %s157, 3
        %s159 = smul.addr %s158, 4
        %s160 = scalar_lea.vmem %s0, %s159
      $region28: #{input_layer.1} parent=23 // pred_fallthru
        _
    $region24: #{input_layer.1} parent=5 // pred_fallthru
      _
    %p161 = scmp.le.s32.totalorder 1, %s9
    %p162 = scmp.lt.s32.totalorder %s9, 3
    %p163 = pnand %p161, %p162
    %p164 = pneg %p163
    // Predicated region
    $region29: #{input_layer.1} parent=5 // pred_check
      _
    $region30: #{input_layer.1} parent=5 // pred_check_branch
      %166 = sbr.rel (%p163) target = $region32
    $region31: #{input_layer.1} parent=5 // pred_region
      %s167 = ssub.s32 %s9, 1
      %p168 = scmp.lt.s32.totalorder %s18, 1
      %s169 = scalar_select %p168, %s18, 1
      %s170 = smul.addr %s169, 3
      %s171 = smul.addr %s170, 4
      %s172 = scalar_lea.vmem %s0, %s171
      %p173 = pneg %p47
      %p174 = pneg %p44
      %p175 = pneg %p68
      %p176 = pneg %p65
      %s177 = smul.u32 2, %s19
      %p178 = scmp.lt.s32.totalorder %s177, 1
      %s179 = scalar_select %p178, %s177, 1
      %s180 = smul.addr %s179, 8
      %s181 = scalar_lea.vmem %s2, %s180
      %p182 = pneg %p94
      %p183 = pneg %p91
      %p184 = pneg %p122
      %p185 = pneg %p119
      %s186 = smul.u32 2, %s19
      %p187 = scmp.lt.s32.totalorder %s18, 1
      %s188 = scalar_select %p187, %s18, 1
      %p189 = scmp.lt.s32.totalorder %s186, 1
      %s190 = scalar_select %p189, %s186, 1
      %s191 = smul.addr %s188, 2
      %s192 = sadd.s32 %s190, %s191
      %s193 = smul.addr %s192, 8
      %s194 = scalar_lea.vmem %s3, %s193
      %p195 = scmp.lt.s32.totalorder %s18, 1
      %s196 = scalar_select %p195, %s18, 1
      %s197 = smul.addr %s196, 3
      %s198 = smul.addr %s197, 4
      %s199 = scalar_lea.vmem %s0, %s198
      %s200 = smul.u32 2, %s19
      %p201 = scmp.lt.s32.totalorder %s200, 1
      %s202 = scalar_select %p201, %s200, 1
      %s203 = smul.addr %s202, 8
      %s204 = scalar_lea.vmem %s2, %s203
      %s205 = smul.u32 2, %s19
      %s206 = smul.u32 2, %s19
      %p207 = scmp.lt.s32.totalorder %s18, 1
      %s208 = scalar_select %p207, %s18, 1
      %p209 = scmp.lt.s32.totalorder %s206, 1
      %s210 = scalar_select %p209, %s206, 1
      %s211 = smul.addr %s208, 2
      %s212 = sadd.s32 %s210, %s211
      %s213 = smul.addr %s212, 8
      %s214 = scalar_lea.vmem %s3, %s213
      %s215 = smul.u32 2, %s19
      %s217 = smul.u32 %s19, 16
      %s218 = sshra.s32 %s217, 3
      %s219 = sand.u32 %s217, 7
      %s220 = smul.addr %s218, 4
      %s221 = scalar_lea.vmem %s199, %s220
      %v222 = vld [vmem:[%s221] sm:$0xf]
      %v223 = vld [vmem:[%s221 + $0x4] sm:$0xf]
      %v224 = vld [vmem:[%s221 + $0x8] sm:$0x1]
      %v225 = vld [vmem:[%s1] sm:$0xf]
      %s226 = scalar_lea.vmem %s1, 4
      %v227 = vld [vmem:[%s226] sm:$0xf]
      %v231 = vunpack.c.l.b16 %v222
      %v232 = vunpack.c.l.b16 %v223
      %v233 = vunpack.c.l.b16 %v224
      %v234 = vpack.c.b16 %v232, %v231
      %v235 = vpack.c.b16 %v233, %v233
      %vm236 = vsmask.f32 7424
      %v238 = vshrl.u32 %v234, 16
      %v240 = vshll.u32 %v234, 16
      %v242 = vrot.slane %v240, 1
      %v243 = vor.u32 %v238, %v242
      %v245 = vshll.u32 %v235, 16
      %v247 = vrot.slane %v245, 1
      %v248 = vsel %vm236, %v243, %v247
      %vm249 = vcmask 64512
      %v251 = vsel %vm249, %v248, 0
      %vm253 = vcmask 1043456
      %v255 = vsel %vm253, %v227, 0
      %257 = vmatprep.subr.bf16.mxu0 0
      %258 = vmatpush1.bf16.msra.mxu0 %v255
      %259 = vmatprep.subr.bf16.mxu0 0
      %260 = vmatpush1.bf16.msra.mxu0 0
      %261 = vmatprep.subr.bf16.mxu0 0
      %262 = vmatpush1.bf16.msra.mxu0 0
      %263 = vmatprep.subr.bf16.mxu0 0
      %264 = vmatpush1.bf16.msra.mxu0 0
      %265 = vmatprep.subr.bf16.mxu0 0
      %266 = vmatpush1.bf16.msra.mxu0 0
      %267 = vmatprep.subr.bf16.mxu0 0
      %268 = vmatpush1.bf16.msra.mxu0 0
      %269 = vmatprep.subr.bf16.mxu0 0
      %270 = vmatpush1.bf16.msra.mxu0 0
      %271 = vmatprep.subr.bf16.mxu0 0
      %272 = vmatpush1.bf16.msra.mxu0 0
      %273 = vmatprep.subr.bf16.mxu0 0
      %274 = vmatpush1.bf16.msra.mxu0 0
      %275 = vmatprep.subr.bf16.mxu0 0
      %276 = vmatpush1.bf16.msra.mxu0 0
      %277 = vmatprep.subr.bf16.mxu0 0
      %278 = vmatpush1.bf16.msra.mxu0 0
      %279 = vmatprep.subr.bf16.mxu0 0
      %280 = vmatpush1.bf16.msra.mxu0 0
      %281 = vmatprep.subr.bf16.mxu0 0
      %282 = vmatpush1.bf16.msra.mxu0 0
      %283 = vmatprep.subr.bf16.mxu0 0
      %284 = vmatpush1.bf16.msra.mxu0 0
      %285 = vmatprep.subr.bf16.mxu0 0
      %286 = vmatpush1.bf16.msra.mxu0 0
      %287 = vmatprep.subr.bf16.mxu0 0
      %288 = vmatpush1.bf16.msra.mxu0 0
      %289 = vmatprep.mubr.bf16.mxu0 0
      %290 = vmatmul.mubr.bf16.gmra.mrb[0].mxu0 %v251
      %v291 = vpop.f32.mrb[0].mxu0
      %v292 = vadd.f32 0.0, %v291
      %v293 = vpop.f32.mrb[0].mxu0
      %v294 = vpop.f32.mrb[0].mxu0
      %v295 = vadd.f32 0.0, %v294
      %v296 = vpop.f32.mrb[0].mxu0
      %297 = vdwg.mxu0
      %v298 = vsel %vm249, %v234, 0
      %v301 = vsel %vm253, %v225, 0
      %303 = vmatprep.subr.bf16.mxu0 0
      %304 = vmatpush1.bf16.msra.mxu0 %v301
      %305 = vmatprep.subr.bf16.mxu0 0
      %306 = vmatpush1.bf16.msra.mxu0 0
      %307 = vmatprep.subr.bf16.mxu0 0
      %308 = vmatpush1.bf16.msra.mxu0 0
      %309 = vmatprep.subr.bf16.mxu0 0
      %310 = vmatpush1.bf16.msra.mxu0 0
      %311 = vmatprep.subr.bf16.mxu0 0
      %312 = vmatpush1.bf16.msra.mxu0 0
      %313 = vmatprep.subr.bf16.mxu0 0
      %314 = vmatpush1.bf16.msra.mxu0 0
      %315 = vmatprep.subr.bf16.mxu0 0
      %316 = vmatpush1.bf16.msra.mxu0 0
      %317 = vmatprep.subr.bf16.mxu0 0
      %318 = vmatpush1.bf16.msra.mxu0 0
      %319 = vmatprep.subr.bf16.mxu0 0
      %320 = vmatpush1.bf16.msra.mxu0 0
      %321 = vmatprep.subr.bf16.mxu0 0
      %322 = vmatpush1.bf16.msra.mxu0 0
      %323 = vmatprep.subr.bf16.mxu0 0
      %324 = vmatpush1.bf16.msra.mxu0 0
      %325 = vmatprep.subr.bf16.mxu0 0
      %326 = vmatpush1.bf16.msra.mxu0 0
      %327 = vmatprep.subr.bf16.mxu0 0
      %328 = vmatpush1.bf16.msra.mxu0 0
      %329 = vmatprep.subr.bf16.mxu0 0
      %330 = vmatpush1.bf16.msra.mxu0 0
      %331 = vmatprep.subr.bf16.mxu0 0
      %332 = vmatpush1.bf16.msra.mxu0 0
      %333 = vmatprep.subr.bf16.mxu0 0
      %334 = vmatpush1.bf16.msra.mxu0 0
      %335 = vmatprep.mubr.bf16.mxu0 0
      %336 = vmatmul.mubr.bf16.gmra.mrb[0].mxu0 %v298
      %v337 = vpop.f32.mrb[0].mxu0
      %v338 = vadd.f32 %v292, %v337
      %v339 = vpop.f32.mrb[0].mxu0
      %v340 = vpop.f32.mrb[0].mxu0
      %v341 = vadd.f32 %v295, %v340
      %v342 = vpop.f32.mrb[0].mxu0
      %343 = vdwg.mxu0
      %v344 = vlaneseq
      %v345 = vshrl.u32 %v344, 7
      %v346 = vadd.s32 %v345, 8
      %v347 = vstv %s217
      %v348 = vadd.s32 %v347, %v345
      %v349 = vadd.s32 %v347, %v346
      %vm350 = vcmp.eq.s32.totalorder %v348, 0
      %vm351 = vcmp.eq.s32.totalorder %v349, 0
      %v352 = vsel %vm350, 0.0, %v338
      %v353 = vsel %vm351, 0.0, %v341
      %v354 = vld [vmem:[%s204] sm:$0xff]
      %v355 = vld [vmem:[%s204 + $0x8] sm:$0xff]
      %v356 = vadd.f32 %v352, %v354
      %v357 = vadd.f32 %v353, %v355
      %vm358 = vcmask 261120
      %359 = vst.msk [vmem:[%s214] sm:$0xff] %vm358, %v356
      %360 = vst.msk [vmem:[%s214 + $0x8] sm:$0xff] %vm358, %v357
      %s361 = smul.u32 2, %s19
      %p362 = scmp.lt.s32.totalorder %s18, 1
      %s363 = scalar_select %p362, %s18, 1
      %p364 = scmp.lt.s32.totalorder %s361, 1
      %s365 = scalar_select %p364, %s361, 1
      %s366 = smul.addr %s363, 2
      %s367 = sadd.s32 %s365, %s366
      %s368 = smul.addr %s367, 8
      %s369 = scalar_lea.vmem %s3, %s368
      // Predicated region
      $region33: #{input_layer.1} parent=31 // pred_check
        %p370 = pneg %p119
      $region34: #{input_layer.1} parent=31 // pred_check_branch
        %372 = sbr.rel (%p370) target = $region36
      $region35: #{input_layer.1} parent=31 // pred_region
        %s373 = smul.u32 2, %s19
      $region36: #{input_layer.1} parent=31 // pred_fallthru
        _
    $region32: #{input_layer.1} parent=5 // pred_fallthru
      _
    %p374 = scmp.le.s32.totalorder 2, %s9
    // Predicated region
    $region37: #{input_layer.1} parent=5 // pred_check
      %p375 = pneg %p374
    $region38: #{input_layer.1} parent=5 // pred_check_branch
      %377 = sbr.rel (%p375) target = $region40
    $region39: #{input_layer.1} parent=5 // pred_region
      %s378 = ssub.s32 %s9, 2
      // Predicated region
      $region41: #{input_layer.1} parent=39 // pred_check
        %p379 = pneg %p125
      $region42: #{input_layer.1} parent=39 // pred_check_branch
        %381 = sbr.rel (%p379) target = $region44
      $region43: #{input_layer.1} parent=39 // pred_region
        %s382 = smul.u32 2, %s21
        %p383 = scmp.lt.s32.totalorder %s20, 1
        %s384 = scalar_select %p383, %s20, 1
        %p385 = scmp.lt.s32.totalorder %s382, 1
        %s386 = scalar_select %p385, %s382, 1
        %s387 = smul.addr %s384, 2
        %s388 = sadd.s32 %s386, %s387
        %s389 = smul.addr %s388, 8
        %s390 = scalar_lea.vmem %s3, %s389
      $region44: #{input_layer.1} parent=39 // pred_fallthru
        _
    $region40: #{input_layer.1} parent=5 // pred_fallthru
      _
  $region6: #{input_layer.1} parent=0 // loop_footer
    %s13 = sadd.s32 1, %s9
  $region7: #{input_layer.1} parent=0 // loop_footer_branch
    %8 = sbr.rel target = $region3
  $region8: #{input_layer.1} parent=0 // loop_exit
    _

</llo_original>
